<compile_context>
chip_gen: v7x
topology: tpu7x:2x2x1
jax: 0.10.0
libtpu: 0.0.40
codegen_flags: <defaults>
</compile_context>

<pallas_src>
import functools
import math

import jax
import jax.numpy as jnp
from jax.experimental import pallas as pl
from jax.experimental.pallas import tpu as pltpu


def _matmul_cos_kernel(p_ref, w_ref, o_ref, *, Bt):
    """One sub-batch of Bt images per grid step.

    p_ref: (Bt, Kp, HoWo)  lane-dense patches (K = C*kh*kw + 1 bias row, sublane-padded)
    w_ref: (O, Kp)         flattened conv weight with the bias folded in as a column
    o_ref: (Bt, O, HoWo)   lane-dense output block
    """
    w = w_ref[...]
    for b in range(Bt):  # static unroll; Bt is kept small by the wrapper
        # Single fused contraction per image; accumulation stays in MXU result
        # registers (no VMEM accumulator round-trip), result is already (O, HoWo)
        # so no transpose is needed before the lane-dense store.
        acc = jnp.dot(w, p_ref[b], preferred_element_type=jnp.float32)
        o_ref[b] = jnp.cos(acc).astype(o_ref.dtype)


def random_cos_forward(x, weight, bias, *, stride=1, padding=0):
    """cos(conv2d(x, weight, bias, stride, padding)) via a fused Pallas kernel."""
    B, C, H, W = x.shape
    O, Cw, kh, kw = weight.shape
    assert C == Cw
    sh = sw = int(stride)
    ph = pw = int(padding)
    Ho = (H + 2 * ph - kh) // sh + 1
    Wo = (W + 2 * pw - kw) // sw + 1
    HoWo = Ho * Wo

    # Perf-critical layout assumptions — fail loudly instead of silently relayouting.
    assert HoWo % 128 == 0, f"Ho*Wo={HoWo} must be a multiple of 128 (lane-dense stores)"
    assert O % 8 == 0, f"out_channels={O} must be a multiple of 8 (sublane alignment)"

    # ---- wrapper-side im2col (cheap XLA ops; ~kh*kw x input bytes = ~73 KB here) ----
    # TODO(synk): for large H*W*C where the patch blow-up matters, switch back to a
    # fused-tap in-kernel path; at these shapes the dense-lane layout wins decisively.
    x_pad = jnp.pad(x, ((0, 0), (0, 0), (ph, ph), (pw, pw)))
    taps = [x_pad[:, :, di:di + sh * (Ho - 1) + 1:sh, dj:dj + sw * (Wo - 1) + 1:sw]
            for di in range(kh) for dj in range(kw)]              # each (B, C, Ho, Wo)
    patches = jnp.stack(taps, axis=2).reshape(B, C * kh * kw, HoWo)

    # Fold the bias into the contraction: ones row in patches, bias column in weights.
    patches = jnp.concatenate([patches, jnp.ones((B, 1, HoWo), patches.dtype)], axis=1)
    w2d = jnp.concatenate([weight.reshape(O, C * kh * kw).astype(x.dtype),
                           bias.reshape(O, 1).astype(x.dtype)], axis=1)

    # Pad the contraction dim to a sublane multiple (zero rows/cols are inert).
    K = C * kh * kw + 1
    Kp = ((K + 7) // 8) * 8
    if Kp != K:
        patches = jnp.pad(patches, ((0, 0), (0, Kp - K), (0, 0)))
        w2d = jnp.pad(w2d, ((0, 0), (0, Kp - K)))
    patches = patches.astype(x.dtype)
    # TODO(synk): on v5e, cast patches/w2d to bf16 (keep f32 accumulate) for MXU rate.

    # ---- choose Bt images per grid step: amortize per-step overhead, keep >=2 steps
    # when possible (v7x 2-TC sharding) and keep blocks a few MiB at most. ----
    per_img_bytes = (Kp * HoWo + O * HoWo) * 4
    Bt = B
    while Bt > 1 and (B // Bt < 2 or Bt * per_img_bytes > 8 * 1024 * 1024):
        Bt -= 1
        while B % Bt:
            Bt -= 1
    num_steps = B // Bt

    flops = 2 * B * O * HoWo * Kp
    bytes_accessed = 4 * (B * Kp * HoWo + O * Kp + B * O * HoWo)
    cost = pl.CostEstimate(flops=flops, transcendentals=B * O * HoWo,
                           bytes_accessed=bytes_accessed)

    compiler_kwargs = dict(dimension_semantics=("parallel",))
    block_bytes = 4 * (Bt * Kp * HoWo + O * Kp + Bt * O * HoWo)
    if 3 * block_bytes > 32 * 1024 * 1024:  # double-buffered blocks outgrow default scoped VMEM
        compiler_kwargs["vmem_limit_bytes"] = min(3 * block_bytes + (8 << 20), 96 << 20)

    out = pl.pallas_call(
        functools.partial(_matmul_cos_kernel, Bt=Bt),
        out_shape=jax.ShapeDtypeStruct((B, O, HoWo), x.dtype),
        grid_spec=pltpu.PrefetchScalarGridSpec(
            num_scalar_prefetch=0,
            grid=(num_steps,),
            in_specs=[
                pl.BlockSpec((Bt, Kp, HoWo), lambda i: (i, 0, 0)),   # patches sub-batch
                pl.BlockSpec((O, Kp), lambda i: (0, 0)),             # weights (+bias col)
            ],
            out_specs=pl.BlockSpec((Bt, O, HoWo), lambda i: (i, 0, 0)),
        ),
        compiler_params=pltpu.CompilerParams(**compiler_kwargs),
        cost_estimate=cost,
    )(patches, w2d)

    # (B, O, Ho*Wo) -> (B, O, Ho, Wo): pure metadata reshape, no XLA transpose pass.
    return out.reshape(B, O, Ho, Wo)


def init_conv_params(key, out_ch, in_ch, kh, kw, dtype=jnp.float32):
    """Deterministic init mirroring nn.Conv2d defaults (uniform +/- 1/sqrt(fan_in))."""
    kw_key, kb_key = jax.random.split(key)
    fan_in = in_ch * kh * kw
    bound = 1.0 / math.sqrt(fan_in)
    weight = jax.random.uniform(kw_key, (out_ch, in_ch, kh, kw),
                                minval=-bound, maxval=bound, dtype=dtype)
    bias = jax.random.uniform(kb_key, (out_ch,),
                              minval=-bound, maxval=bound, dtype=dtype)
    return weight, bias


if __name__ == "__main__":
    key = jax.random.PRNGKey(0)
    kx, kp = jax.random.split(key)

    # Shapes consistent with the module: RandomCos(4, 32, kernel_size=3, padding=1)
    B, C, H, W = 2, 4, 16, 16
    O, KH, KW = 32, 3, 3
    stride, padding = 1, 1

    x = jax.random.normal(kx, (B, C, H, W), dtype=jnp.float32)
    weight, bias = init_conv_params(kp, O, C, KH, KW)

    out = random_cos_forward(x, weight, bias, stride=stride, padding=padding)
    out = jax.block_until_ready(out)

    # Reference check against XLA conv (pure JAX, no torch).
    ref_conv = jax.lax.conv_general_dilated(
        x, weight, window_strides=(stride, stride),
        padding=((padding, padding), (padding, padding)),
        dimension_numbers=("NCHW", "OIHW", "NCHW"))
    ref = jnp.cos(ref_conv + bias.reshape(1, O, 1, 1))
    assert out.shape == ref.shape
    assert jnp.allclose(out, ref, atol=1e-4, rtol=1e-4)

    print("KERNEL_OK")
</pallas_src>

<mosaic_0001>
module attributes {stable_mosaic.version = 11 : i64} {
  func.func @_matmul_cos_kernel(%arg0: i32, %arg1: memref<1x40x256xf32, #tpu.memory_space<vmem>>, %arg2: memref<32x40xf32, #tpu.memory_space<vmem>>, %arg3: memref<1x32x256xf32, #tpu.memory_space<vmem>>) attributes {dimension_semantics = [#tpu.dimension_semantics<parallel>], iteration_bounds = array<i64: 2>, scalar_prefetch = 0 : i64, scratch_operands = 0 : i64, tpu.core_type = #tpu.core_type<tc>, window_params = [{transform_indices = @transform_0, window_bounds = array<i64: 1, 40, 256>}, {pipeline_mode = #tpu.pipeline_mode<synchronous>, transform_indices = @transform_1, window_bounds = array<i64: 32, 40>}, {transform_indices = @transform_2, window_bounds = array<i64: 1, 32, 256>}]} {
    %c0 = arith.constant 0 : index
    %c0_0 = arith.constant 0 : index
    %0 = vector.load %arg2[%c0, %c0_0] : memref<32x40xf32, #tpu.memory_space<vmem>>, vector<32x40xf32>
    %c0_1 = arith.constant 0 : index
    %c0_2 = arith.constant 0 : index
    %c0_3 = arith.constant 0 : index
    %1 = vector.load %arg1[%c0_1, %c0_2, %c0_3] : memref<1x40x256xf32, #tpu.memory_space<vmem>>, vector<1x40x256xf32>
    %2 = vector.shape_cast %1 : vector<1x40x256xf32> to vector<40x256xf32>
    %cst = arith.constant dense<0.000000e+00> : vector<32x256xf32>
    %3 = tpu.matmul %0, %2, %cst {dimension_numbers = #tpu.dot_dimension_numbers<[1], [0], [0], [1], [0, 0, 1, 1], [], []>} : vector<32x40xf32>, vector<40x256xf32>, vector<32x256xf32> -> vector<32x256xf32>
    %4 = math.cos %3 : vector<32x256xf32>
    %c0_4 = arith.constant 0 : index
    %c0_5 = arith.constant 0 : index
    %c0_6 = arith.constant 0 : index
    %5 = vector.load %arg3[%c0_4, %c0_5, %c0_6] : memref<1x32x256xf32, #tpu.memory_space<vmem>>, vector<1x32x256xf32>
    %6 = vector.shape_cast %5 : vector<1x32x256xf32> to vector<32x256xf32>
    %7 = vector.shape_cast %4 : vector<32x256xf32> to vector<1x32x256xf32>
    tpu.vector_store %arg3[%c0_4, %c0_5, %c0_6], %7 {strides = array<i32>} : memref<1x32x256xf32, #tpu.memory_space<vmem>>, vector<1x32x256xf32>,
    return
  }
  func.func @transform_0(%arg0: i32) -> (i32, i32, i32) {
    %c0_i32 = arith.constant 0 : i32
    %c0_i32_0 = arith.constant 0 : i32
    %c0_i32_1 = arith.constant 0 : i32
    return %arg0, %c0_i32, %c0_i32_0 : i32, i32, i32
  }
  func.func @transform_1(%arg0: i32) -> (i32, i32) {
    %c0_i32 = arith.constant 0 : i32
    %c0_i32_0 = arith.constant 0 : i32
    %c0_i32_1 = arith.constant 0 : i32
    return %c0_i32, %c0_i32_0 : i32, i32
  }
  func.func @transform_2(%arg0: i32) -> (i32, i32, i32) {
    %c0_i32 = arith.constant 0 : i32
    %c0_i32_0 = arith.constant 0 : i32
    %c0_i32_1 = arith.constant 0 : i32
    return %arg0, %c0_i32, %c0_i32_0 : i32, i32, i32
  }
}

</mosaic_0001>

<llo_original>
// kernel: tpu_custom_call.1
$region0: #{tpu_custom_call.1}
  #allocation0 [shape = 'u32[]', space=smem, size = 0x4, offset = 0x4, fixed_abs, tag = 'smem constant byte address 0x4 - core index']
  #allocation1 [shape = 'u32[144,128]{1,0:T(1,128)}', space=vmem, size = 0x12000, scoped, tag = 'internal scratch']
  %s0 = inlined_call_operand.hbm [shape: f32[2,40,256], index: 0, kind: input, shape index: {}]
  %s1 = inlined_call_operand.hbm [shape: f32[32,40], index: 1, kind: input, shape index: {}]
  %s2 = inlined_call_operand.hbm [shape: f32[2,32,256], index: 2, kind: output, shape index: {}]
  %s3 = sld [smem:[#allocation0]]
  $region49: #{tpu_custom_call.1} parent=0
    _
  %s5 = ssub.s32 1, %s3
  %s6 = scalar_select 0, %s5, %s3
  $region1: #{tpu_custom_call.1} parent=0
    #allocation2 [shape = 'u8[81920]{0}', space=vmem, size = 0x14000, scoped, tag = 'input window, operand 0']
    #allocation3 [shape = 's32[2]{0}', space=sflag, size = 0x8, scoped, tag = 'scoped memory for tpu_custom_call.1']
    #allocation4 [shape = 's32[2]{0}', space=sflag, size = 0x8, scoped, tag = 'scoped memory for tpu_custom_call.1']
    #allocation5 [shape = 'u8[16384]{0}', space=vmem, size = 0x4000, scoped, tag = 'input window, operand 1, single buffered']
    #allocation6 [shape = 's32[1]{0}', space=sflag, size = 0x4, scoped, tag = 'scoped memory for tpu_custom_call.1']
    #allocation7 [shape = 'u8[65536]{0}', space=vmem, size = 0x10000, scoped, tag = 'output window, operand 0']
    %7 = vsyncpa [#allocation3], 0
    %s8 = scalar_lea.sflag [#allocation3], 1
    %9 = vsyncpa %s8, 0
    %10 = vsyncpa [#allocation6], 0
    %11 = vsyncpa [#allocation4], 0
    %s12 = scalar_lea.sflag [#allocation4], 1
    %13 = vsyncpa %s12, 0
    loop: start=0, step=1, limit=4
    $region2: #{tpu_custom_call.1} parent=1 // loop_pre_header
      _
    $region3: #{tpu_custom_call.1} parent=1 // loop_header
      %s15 = sphi 0, %s19
      %p16 = scmp.ge.s32.totalorder %s15, 4
      %s25 = sphi 0, %s27
      %s28 = sphi 0, %s25
      %s29 = sphi 0, %s28
      %s45 = sphi 0, %s29
      %s49 = sphi 0, %s49
      %s51 = sphi 0, %s49
      %s52 = sphi 0, %s51
      %s66 = sphi 0, %s52
      %s72 = sphi 0, %s74
      %s75 = sphi 0, %s72
      %s76 = sphi 0, %s75
      %s92 = sphi 0, %s76
    $region4: #{tpu_custom_call.1} parent=1 // loop_header_branch
      %18 = sbr.rel (%p16) target = $region8
    $region5: #{tpu_custom_call.1} parent=1 // loop_body
      %s20 = ssub.s32 %s15, 1
      %s21 = ssub.s32 %s15, 2
      %s22 = sadd.s32 %s15, 1
      %s23 = ssub.s32 %s15, %s22
      %p24 = scmp.eq.s32.totalorder %s23, 0
      %s26 = sadd.s32 %s25, 1
      %s27 = scalar_select %p24, %s25, %s26
      %p30 = pneg %p24
      %p31 = scmp.eq.s32.totalorder %s15, 1
      %p32 = por %p30, %p31
      %p33 = scmp.ne.s32.totalorder %s25, %s28
      %p34 = scmp.eq.s32.totalorder %s15, 0
      %p35 = por %p33, %p34
      %p36 = scmp.ne.s32.totalorder %s25, %s28
      %p37 = scmp.eq.s32.totalorder %s20, 1
      %p38 = por %p36, %p37
      %p39 = scmp.ne.s32.totalorder %s28, %s29
      %p40 = scmp.eq.s32.totalorder %s20, 0
      %p41 = por %p39, %p40
      %p42 = scmp.ne.s32.totalorder %s28, %s29
      %p43 = scmp.eq.s32.totalorder %s21, 1
      %p44 = por %p42, %p43
      %p46 = scmp.ne.s32.totalorder %s29, %s45
      %p47 = scmp.eq.s32.totalorder %s21, 0
      %p48 = por %p46, %p47
      %s50 = sadd.s32 %s49, 1
      %p53 = scmp.eq.s32.totalorder %s15, 1
      %p54 = scmp.ne.s32.totalorder %s49, %s51
      %p55 = scmp.eq.s32.totalorder %s15, 0
      %p56 = por %p54, %p55
      %p57 = scmp.ne.s32.totalorder %s49, %s51
      %p58 = scmp.eq.s32.totalorder %s20, 1
      %p59 = por %p57, %p58
      %p60 = scmp.ne.s32.totalorder %s51, %s52
      %p61 = scmp.eq.s32.totalorder %s20, 0
      %p62 = por %p60, %p61
      %p63 = scmp.ne.s32.totalorder %s51, %s52
      %p64 = scmp.eq.s32.totalorder %s21, 1
      %p65 = por %p63, %p64
      %p67 = scmp.ne.s32.totalorder %s52, %s66
      %p68 = scmp.eq.s32.totalorder %s21, 0
      %p69 = por %p67, %p68
      %s70 = ssub.s32 %s15, %s22
      %p71 = scmp.eq.s32.totalorder %s70, 0
      %s73 = sadd.s32 %s72, 1
      %s74 = scalar_select %p71, %s72, %s73
      %p77 = pneg %p71
      %p78 = scmp.eq.s32.totalorder %s15, 1
      %p79 = por %p77, %p78
      %p80 = scmp.ne.s32.totalorder %s72, %s75
      %p81 = scmp.eq.s32.totalorder %s15, 0
      %p82 = por %p80, %p81
      %p83 = scmp.ne.s32.totalorder %s72, %s75
      %p84 = scmp.eq.s32.totalorder %s20, 1
      %p85 = por %p83, %p84
      %p86 = scmp.ne.s32.totalorder %s75, %s76
      %p87 = scmp.eq.s32.totalorder %s20, 0
      %p88 = por %p86, %p87
      %p89 = scmp.ne.s32.totalorder %s75, %s76
      %p90 = scmp.eq.s32.totalorder %s21, 1
      %p91 = por %p89, %p90
      %p93 = scmp.ne.s32.totalorder %s76, %s92
      %p94 = scmp.eq.s32.totalorder %s21, 0
      %p95 = por %p93, %p94
      %p96 = scmp.le.s32.totalorder 1, %s15
      %p97 = scmp.lt.s32.totalorder %s15, 3
      %p98 = pnand %p96, %p97
      %p99 = pneg %p98
      // Predicated region
      $region9: #{tpu_custom_call.1} parent=5 // pred_check
        _
      $region10: #{tpu_custom_call.1} parent=5 // pred_check_branch
        %101 = sbr.rel (%p98) target = $region12
      $region11: #{tpu_custom_call.1} parent=5 // pred_region
        %s102 = ssub.s32 %s15, 1
        // Predicated region
        $region13: #{tpu_custom_call.1} parent=11 // pred_check
          %p103 = pneg %p62
        $region14: #{tpu_custom_call.1} parent=11 // pred_check_branch
          %105 = sbr.rel (%p103) target = $region16
        $region15: #{tpu_custom_call.1} parent=11 // pred_region
          %s107 = ssub.s32 512, 512
          %108 = vsyncadd [#allocation6], %s107
          %s109 = sshll.u32 [#allocation5], 4
          %s110 = int_to_ptr.vmem [resolvable:$true] %s109
          %115 = dma.hbm_to_vmem [thread:$0]  %s1, 512, %s110, [#allocation6], 128, 128, 8
        $region16: #{tpu_custom_call.1} parent=11 // pred_fallthru
          _
      $region12: #{tpu_custom_call.1} parent=5 // pred_fallthru
        _
      %p116 = scmp.lt.s32.totalorder %s15, 2
      // Predicated region
      $region17: #{tpu_custom_call.1} parent=5 // pred_check
        %p117 = pneg %p116
      $region18: #{tpu_custom_call.1} parent=5 // pred_check_branch
        %119 = sbr.rel (%p117) target = $region20
      $region19: #{tpu_custom_call.1} parent=5 // pred_region
        // Predicated region
        $region21: #{tpu_custom_call.1} parent=19 // pred_check
          %p120 = pneg %p35
        $region22: #{tpu_custom_call.1} parent=19 // pred_check_branch
          %122 = sbr.rel (%p120) target = $region24
        $region23: #{tpu_custom_call.1} parent=19 // pred_region
          %s123 = sand.u32 %s25, 1
          %s124 = scalar_lea.sflag [#allocation3], %s123
          %s125 = sand.u32 %s25, 1
          %s126 = smul.addr %s125, 80
          %s127 = scalar_lea.vmem [#allocation2], %s126
          %s129 = ssub.s32 1280, 1280
          %130 = vsyncadd %s124, %s129
          %s131 = smul.addr %s15, 10
          %s132 = smul.addr %s131, 128
          %s133 = scalar_lea.hbm %s0, %s132
          %s134 = sshll.u32 %s127, 4
          %s135 = int_to_ptr.vmem [resolvable:$true] %s134
          %140 = dma.hbm_to_vmem [thread:$0]  %s133, 1280, %s135, %s124, 256, 256, 16
        $region24: #{tpu_custom_call.1} parent=19 // pred_fallthru
          _
      $region20: #{tpu_custom_call.1} parent=5 // pred_fallthru
        _
      %p141 = scmp.le.s32.totalorder 1, %s15
      %p142 = scmp.lt.s32.totalorder %s15, 3
      %p143 = pnand %p141, %p142
      %p144 = pneg %p143
      // Predicated region
      $region25: #{tpu_custom_call.1} parent=5 // pred_check
        _
      $region26: #{tpu_custom_call.1} parent=5 // pred_check_branch
        %146 = sbr.rel (%p143) target = $region28
      $region27: #{tpu_custom_call.1} parent=5 // pred_region
        %s147 = ssub.s32 %s15, 1
        %s148 = sand.u32 %s28, 1
        %s149 = scalar_lea.sflag [#allocation3], %s148
        %s150 = sand.u32 %s28, 1
        %s151 = smul.addr %s150, 80
        %s152 = scalar_lea.vmem [#allocation2], %s151
        // Predicated region
        $region29: #{tpu_custom_call.1} parent=27 // pred_check
          %p153 = pneg %p41
        $region30: #{tpu_custom_call.1} parent=27 // pred_check_branch
          %155 = sbr.rel (%p153) target = $region32
        $region31: #{tpu_custom_call.1} parent=27 // pred_region
          %156 = dma.done %s149, 1280
        $region32: #{tpu_custom_call.1} parent=27 // pred_fallthru
          _
        // Predicated region
        $region33: #{tpu_custom_call.1} parent=27 // pred_check
          %p157 = pneg %p62
        $region34: #{tpu_custom_call.1} parent=27 // pred_check_branch
          %159 = sbr.rel (%p157) target = $region36
        $region35: #{tpu_custom_call.1} parent=27 // pred_region
          %160 = dma.done [#allocation6], 512
        $region36: #{tpu_custom_call.1} parent=27 // pred_fallthru
          _
        %s161 = sand.u32 %s28, 1
        %s162 = scalar_lea.sflag [#allocation3], %s161
        %s163 = sand.u32 %s28, 1
        %s164 = smul.addr %s163, 80
        %s165 = scalar_lea.vmem [#allocation2], %s164
        %p166 = pneg %p41
        %p167 = pneg %p38
        %p168 = pneg %p62
        %p169 = pneg %p59
        %p170 = pneg %p88
        %p171 = pneg %p85
        %s172 = sand.u32 %s75, 1
        %s173 = scalar_lea.sflag [#allocation4], %s172
        %s174 = sand.u32 %s75, 1
        %s175 = smul.addr %s174, 64
        %s176 = scalar_lea.vmem [#allocation7], %s175
        %v177 = vld [vmem:[#allocation5] sm:$0xff]
        %v178 = vld [vmem:[#allocation5 + $0x8] sm:$0xff]
        %v179 = vld [vmem:[#allocation5 + $0x10] sm:$0xff]
        %v180 = vld [vmem:[#allocation5 + $0x18] sm:$0xff]
        %v181 = vld [vmem:[%s152] sm:$0xff]
        %v182 = vld [vmem:[%s152 + $0x8] sm:$0xff]
        %v183 = vld [vmem:[%s152 + $0x10] sm:$0xff]
        %v184 = vld [vmem:[%s152 + $0x18] sm:$0xff]
        %v185 = vld [vmem:[%s152 + $0x20] sm:$0xff]
        %v186 = vld [vmem:[%s152 + $0x28] sm:$0xff]
        %v187 = vld [vmem:[%s152 + $0x30] sm:$0xff]
        %v188 = vld [vmem:[%s152 + $0x38] sm:$0xff]
        %v189 = vld [vmem:[%s152 + $0x40] sm:$0xff]
        %v190 = vld [vmem:[%s152 + $0x48] sm:$0xff]
        %vm191 = vcmask 326656
        %v193 = vsel %vm191, %v177, 0
        %v196 = vsel %vm191, %v178, 0
        %v199 = vsel %vm191, %v179, 0
        %v202 = vsel %vm191, %v180, 0
        %204 = vmatprep.subr.mxu0 %v182
        %205 = vmatpush1.msra.mxu0 %v181
        %206 = vmatprep.subr.mxu0 %v184
        %207 = vmatpush1.msra.mxu0 %v183
        %208 = vmatprep.subr.mxu0 %v186
        %209 = vmatpush1.msra.mxu0 %v185
        %210 = vmatprep.subr.mxu0 %v188
        %211 = vmatpush1.msra.mxu0 %v187
        %212 = vmatprep.subr.mxu0 %v190
        %213 = vmatpush1.msra.mxu0 %v189
        %214 = vmatprep.subr.mxu0 0.0
        %215 = vmatpush1.msra.mxu0 0.0
        %216 = vmatprep.subr.mxu0 0.0
        %217 = vmatpush1.msra.mxu0 0.0
        %218 = vmatprep.subr.mxu0 0.0
        %219 = vmatpush1.msra.mxu0 0.0
        %220 = vmatprep.subr.mxu0 0.0
        %221 = vmatpush1.msra.mxu0 0.0
        %222 = vmatprep.subr.mxu0 0.0
        %223 = vmatpush1.msra.mxu0 0.0
        %224 = vmatprep.subr.mxu0 0.0
        %225 = vmatpush1.msra.mxu0 0.0
        %226 = vmatprep.subr.mxu0 0.0
        %227 = vmatpush1.msra.mxu0 0.0
        %228 = vmatprep.subr.mxu0 0.0
        %229 = vmatpush1.msra.mxu0 0.0
        %230 = vmatprep.subr.mxu0 0.0
        %231 = vmatpush1.msra.mxu0 0.0
        %232 = vmatprep.subr.mxu0 0.0
        %233 = vmatpush1.msra.mxu0 0.0
        %234 = vmatprep.subr.mxu0 0.0
        %235 = vmatpush1.msra.mxu0 0.0
        %236 = vmatprep.subr.mxu0 0.0
        %237 = vmatpush1.msra.mxu0 0.0
        %238 = vmatprep.subr.mxu0 0.0
        %239 = vmatpush1.msra.mxu0 0.0
        %240 = vmatprep.subr.mxu0 0.0
        %241 = vmatpush1.msra.mxu0 0.0
        %242 = vmatprep.subr.mxu0 0.0
        %243 = vmatpush1.msra.mxu0 0.0
        %244 = vmatprep.subr.mxu0 0.0
        %245 = vmatpush1.msra.mxu0 0.0
        %246 = vmatprep.subr.mxu0 0.0
        %247 = vmatpush1.msra.mxu0 0.0
        %248 = vmatprep.subr.mxu0 0.0
        %249 = vmatpush1.msra.mxu0 0.0
        %250 = vmatprep.subr.mxu0 0.0
        %251 = vmatpush1.msra.mxu0 0.0
        %252 = vmatprep.subr.mxu0 0.0
        %253 = vmatpush1.msra.mxu0 0.0
        %254 = vmatprep.subr.mxu0 0.0
        %255 = vmatpush1.msra.mxu0 0.0
        %256 = vmatprep.subr.mxu0 0.0
        %257 = vmatpush1.msra.mxu0 0.0
        %258 = vmatprep.subr.mxu0 0.0
        %259 = vmatpush1.msra.mxu0 0.0
        %260 = vmatprep.subr.mxu0 0.0
        %261 = vmatpush1.msra.mxu0 0.0
        %262 = vmatprep.subr.mxu0 0.0
        %263 = vmatpush1.msra.mxu0 0.0
        %264 = vmatprep.subr.mxu0 0.0
        %265 = vmatpush1.msra.mxu0 0.0
        %266 = vmatprep.subr.mxu0 0.0
        %267 = vmatpush1.msra.mxu0 0.0
        %268 = vmatprep.mubr.f32.mxu0 0.0
        %269 = vmatmul.mubr.f32.gmra.mrb[0].mxu0 %v193
        %v270 = vpop.f32.mrb[0].mxu0
        %v271 = vadd.f32 0.0, %v270
        %v272 = vpop.f32.mrb[0].mxu0
        %v273 = vadd.f32 0.0, %v272
        %274 = vmatprep.mubr.f32.mxu0 0.0
        %275 = vmatmul.mubr.f32.gmra.mrb[0].mxu0 %v196
        %v276 = vpop.f32.mrb[0].mxu0
        %v277 = vadd.f32 0.0, %v276
        %v278 = vpop.f32.mrb[0].mxu0
        %v279 = vadd.f32 0.0, %v278
        %280 = vmatprep.mubr.f32.mxu0 0.0
        %281 = vmatmul.mubr.f32.gmra.mrb[0].mxu0 %v199
        %v282 = vpop.f32.mrb[0].mxu0
        %v283 = vadd.f32 0.0, %v282
        %v284 = vpop.f32.mrb[0].mxu0
        %v285 = vadd.f32 0.0, %v284
        %286 = vmatprep.mubr.f32.mxu0 0.0
        %287 = vmatmul.mubr.f32.gmra.mrb[0].mxu0 %v202
        %v288 = vpop.f32.mrb[0].mxu0
        %v289 = vadd.f32 0.0, %v288
        %v290 = vpop.f32.mrb[0].mxu0
        %v291 = vadd.f32 0.0, %v290
        %292 = vdwg.mxu0
        %v293 = vand.u32 2147483647, %v271
        %vm294 = vcmp.le.f32.partialorder %v293, 0.7853982
        %vm295 = vcmp.lt.s32.totalorder %v271, 0
        %v296 = vand.u32 %v271, 2139095040
        %v297 = vshrl.u32 %v296, 23
        %v298 = vsub.s32 %v297, 127
        %v299 = vand.u32 2147483647, %v271
        %v300 = vand.u32 %v299, 8388607
        %v301 = vor.u32 %v300, 8388608
        %v302 = vsub.s32 0, %v301
        %v303 = vadd.s32 %v298, 1
        %vm304 = vcmp.gt.s32.totalorder %v303, 0
        %v305 = vsel %vm304, %v303, 0
        %v306 = vshrl.u32 %v305, 5
        %v307 = vand.u32 %v305, 31
        %v308 = vsub.s32 32, %v307
        %v309 = vshrl.u32 683565275, %v308
        %v310 = vshll.u32 683565275, %v307
        %v311 = vshrl.u32 2475754826, %v308
        %v312 = vor.u32 %v310, %v311
        %v313 = vshll.u32 2475754826, %v307
        %v314 = vshrl.u32 2131351028, %v308
        %v315 = vor.u32 %v313, %v314
        %v316 = vshll.u32 2131351028, %v307
        %v317 = vshrl.u32 2102212464, %v308
        %v318 = vor.u32 %v316, %v317
        %v319 = vshll.u32 2102212464, %v307
        %v320 = vshrl.u32 920167782, %v308
        %v321 = vor.u32 %v319, %v320
        %v322 = vshll.u32 920167782, %v307
        %v323 = vshrl.u32 1326507024, %v308
        %v324 = vor.u32 %v322, %v323
        %vm325 = vcmp.lt.s32.totalorder %v306, 1
        %vm326 = vcmp.lt.s32.totalorder %v306, 2
        %vm327 = vcmp.lt.s32.totalorder %v306, 3
        %vm328 = vcmp.lt.s32.totalorder %v306, 4
        %v329 = vsel %vm325, %v309, %v312
        %v330 = vsel %vm328, %v318, 2102212464
        %v331 = vsel %vm327, %v315, %v330
        %v332 = vsel %vm326, %v329, %v331
        %v333 = vsel %vm325, %v312, %v315
        %v334 = vsel %vm328, %v321, 920167782
        %v335 = vsel %vm327, %v318, %v334
        %v336 = vsel %vm326, %v333, %v335
        %v337 = vsel %vm325, %v315, %v318
        %v338 = vsel %vm328, %v324, 1326507024
        %v339 = vsel %vm327, %v321, %v338
        %v340 = vsel %vm326, %v337, %v339
        %v341 = vshll.u32 %v301, 8
        %v342 = vmul.u32.u64.compose %v341, %v340
        %v343 = vextract.low.u32 %v342
        %v344 = vextract.high.u32 %v342
        %v345 = vmul.u32.u64.compose %v341, %v336
        %v346 = vextract.low.u32 %v345
        %v347 = vextract.high.u32 %v345
        %v348 = vmul.u32 %v341, %v332
        %v349 = vadd.s32 %v344, %v346
        %vm350 = vc.u32 %v344, %v346
        %v351 = vadd.s32 %v347, 1
        %v352 = vsel %vm350, %v351, %v347
        %v353 = vadd.s32 %v348, %v352
        %v354 = vadd.s32 %v353, 536870912
        %v355 = vshrl.u32 %v354, 30
        %v356 = vshll.u32 %v355, 30
        %v357 = vsub.s32 %v353, %v356
        %vm358 = vcmp.lt.s32.totalorder %v357, 0
        %v359 = vsub.s32 0, %v357
        %v360 = vsel %vm358, %v359, %v357
        %v361 = vclz %v360
        %v362 = vsub.s32 %v361, 2
        %vm363 = vcmp.gt.s32.totalorder 0, %v362
        %v364 = vsel %vm363, 0, %v362
        %v365 = vsub.s32 32, %v364
        %v366 = vshll.u32 %v357, %v364
        %v367 = vshrl.u32 %v349, %v365
        %v368 = vor.u32 %v366, %v367
        %v369 = vsub.s32 4294967266, %v364
        %v370 = vadd.s32 %v369, 127
        %v371 = vshll.u32 %v370, 23
        %v372 = vor.u32 4788187, %v371
        %v373 = vand.u32 2147483647, %v372
        %v375 = vcvt.s32.f32 %v368
        %v376 = vmul.f32 %v375, %v373
        %v377 = vxor.u32 %v376, 2147483648
        %v378 = vsel %vm295, %v377, %v376
        %v379 = vsub.s32 4, %v355
        %v380 = vsel %vm295, %v379, %v355
        %v381 = vsel %vm294, %v271, %v378
        %v382 = vsel %vm294, 0, %v380
        %v383 = vcosq.f32.pop %v381
        %v384 = vsinq.f32.pop %v381
        %vm385 = vweird.f32 %v271
        %v386 = vand.u32 %v382, 3
        %vm387 = vcmp.lt.s32.totalorder %v386, 2
        %vm388 = vcmp.eq.s32.totalorder %v386, 0
        %v389 = vxor.u32 %v384, 2147483648
        %v390 = vsel %vm388, %v383, %v389
        %vm391 = vcmp.eq.s32.totalorder %v386, 2
        %v392 = vxor.u32 %v383, 2147483648
        %v393 = vsel %vm391, %v392, %v384
        %v394 = vsel %vm387, %v390, %v393
        %v395 = vsel %vm385, nan, %v394
        %v396 = vand.u32 2147483647, %v273
        %vm397 = vcmp.le.f32.partialorder %v396, 0.7853982
        %vm398 = vcmp.lt.s32.totalorder %v273, 0
        %v399 = vand.u32 %v273, 2139095040
        %v400 = vshrl.u32 %v399, 23
        %v401 = vsub.s32 %v400, 127
        %v402 = vand.u32 2147483647, %v273
        %v403 = vand.u32 %v402, 8388607
        %v404 = vor.u32 %v403, 8388608
        %v405 = vsub.s32 0, %v404
        %v406 = vadd.s32 %v401, 1
        %vm407 = vcmp.gt.s32.totalorder %v406, 0
        %v408 = vsel %vm407, %v406, 0
        %v409 = vshrl.u32 %v408, 5
        %v410 = vand.u32 %v408, 31
        %v411 = vsub.s32 32, %v410
        %v412 = vshrl.u32 683565275, %v411
        %v413 = vshll.u32 683565275, %v410
        %v414 = vshrl.u32 2475754826, %v411
        %v415 = vor.u32 %v413, %v414
        %v416 = vshll.u32 2475754826, %v410
        %v417 = vshrl.u32 2131351028, %v411
        %v418 = vor.u32 %v416, %v417
        %v419 = vshll.u32 2131351028, %v410
        %v420 = vshrl.u32 2102212464, %v411
        %v421 = vor.u32 %v419, %v420
        %v422 = vshll.u32 2102212464, %v410
        %v423 = vshrl.u32 920167782, %v411
        %v424 = vor.u32 %v422, %v423
        %v425 = vshll.u32 920167782, %v410
        %v426 = vshrl.u32 1326507024, %v411
        %v427 = vor.u32 %v425, %v426
        %vm428 = vcmp.lt.s32.totalorder %v409, 1
        %vm429 = vcmp.lt.s32.totalorder %v409, 2
        %vm430 = vcmp.lt.s32.totalorder %v409, 3
        %vm431 = vcmp.lt.s32.totalorder %v409, 4
        %v432 = vsel %vm428, %v412, %v415
        %v433 = vsel %vm431, %v421, 2102212464
        %v434 = vsel %vm430, %v418, %v433
        %v435 = vsel %vm429, %v432, %v434
        %v436 = vsel %vm428, %v415, %v418
        %v437 = vsel %vm431, %v424, 920167782
        %v438 = vsel %vm430, %v421, %v437
        %v439 = vsel %vm429, %v436, %v438
        %v440 = vsel %vm428, %v418, %v421
        %v441 = vsel %vm431, %v427, 1326507024
        %v442 = vsel %vm430, %v424, %v441
        %v443 = vsel %vm429, %v440, %v442
        %v444 = vshll.u32 %v404, 8
        %v445 = vmul.u32.u64.compose %v444, %v443
        %v446 = vextract.low.u32 %v445
        %v447 = vextract.high.u32 %v445
        %v448 = vmul.u32.u64.compose %v444, %v439
        %v449 = vextract.low.u32 %v448
        %v450 = vextract.high.u32 %v448
        %v451 = vmul.u32 %v444, %v435
        %v452 = vadd.s32 %v447, %v449
        %vm453 = vc.u32 %v447, %v449
        %v454 = vadd.s32 %v450, 1
        %v455 = vsel %vm453, %v454, %v450
        %v456 = vadd.s32 %v451, %v455
        %v457 = vadd.s32 %v456, 536870912
        %v458 = vshrl.u32 %v457, 30
        %v459 = vshll.u32 %v458, 30
        %v460 = vsub.s32 %v456, %v459
        %vm461 = vcmp.lt.s32.totalorder %v460, 0
        %v462 = vsub.s32 0, %v460
        %v463 = vsel %vm461, %v462, %v460
        %v464 = vclz %v463
        %v465 = vsub.s32 %v464, 2
        %vm466 = vcmp.gt.s32.totalorder 0, %v465
        %v467 = vsel %vm466, 0, %v465
        %v468 = vsub.s32 32, %v467
        %v469 = vshll.u32 %v460, %v467
        %v470 = vshrl.u32 %v452, %v468
        %v471 = vor.u32 %v469, %v470
        %v472 = vsub.s32 4294967266, %v467
        %v473 = vadd.s32 %v472, 127
        %v474 = vshll.u32 %v473, 23
        %v475 = vor.u32 4788187, %v474
        %v476 = vand.u32 2147483647, %v475
        %v478 = vcvt.s32.f32 %v471
        %v479 = vmul.f32 %v478, %v476
        %v480 = vxor.u32 %v479, 2147483648
        %v481 = vsel %vm398, %v480, %v479
        %v482 = vsub.s32 4, %v458
        %v483 = vsel %vm398, %v482, %v458
        %v484 = vsel %vm397, %v273, %v481
        %v485 = vsel %vm397, 0, %v483
        %v486 = vcosq.f32.pop %v484
        %v487 = vsinq.f32.pop %v484
        %vm488 = vweird.f32 %v273
        %v489 = vand.u32 %v485, 3
        %vm490 = vcmp.lt.s32.totalorder %v489, 2
        %vm491 = vcmp.eq.s32.totalorder %v489, 0
        %v492 = vxor.u32 %v487, 2147483648
        %v493 = vsel %vm491, %v486, %v492
        %vm494 = vcmp.eq.s32.totalorder %v489, 2
        %v495 = vxor.u32 %v486, 2147483648
        %v496 = vsel %vm494, %v495, %v487
        %v497 = vsel %vm490, %v493, %v496
        %v498 = vsel %vm488, nan, %v497
        %v499 = vand.u32 2147483647, %v277
        %vm500 = vcmp.le.f32.partialorder %v499, 0.7853982
        %vm501 = vcmp.lt.s32.totalorder %v277, 0
        %v502 = vand.u32 %v277, 2139095040
        %v503 = vshrl.u32 %v502, 23
        %v504 = vsub.s32 %v503, 127
        %v505 = vand.u32 2147483647, %v277
        %v506 = vand.u32 %v505, 8388607
        %v507 = vor.u32 %v506, 8388608
        %v508 = vsub.s32 0, %v507
        %v509 = vadd.s32 %v504, 1
        %vm510 = vcmp.gt.s32.totalorder %v509, 0
        %v511 = vsel %vm510, %v509, 0
        %v512 = vshrl.u32 %v511, 5
        %v513 = vand.u32 %v511, 31
        %v514 = vsub.s32 32, %v513
        %v515 = vshrl.u32 683565275, %v514
        %v516 = vshll.u32 683565275, %v513
        %v517 = vshrl.u32 2475754826, %v514
        %v518 = vor.u32 %v516, %v517
        %v519 = vshll.u32 2475754826, %v513
        %v520 = vshrl.u32 2131351028, %v514
        %v521 = vor.u32 %v519, %v520
        %v522 = vshll.u32 2131351028, %v513
        %v523 = vshrl.u32 2102212464, %v514
        %v524 = vor.u32 %v522, %v523
        %v525 = vshll.u32 2102212464, %v513
        %v526 = vshrl.u32 920167782, %v514
        %v527 = vor.u32 %v525, %v526
        %v528 = vshll.u32 920167782, %v513
        %v529 = vshrl.u32 1326507024, %v514
        %v530 = vor.u32 %v528, %v529
        %vm531 = vcmp.lt.s32.totalorder %v512, 1
        %vm532 = vcmp.lt.s32.totalorder %v512, 2
        %vm533 = vcmp.lt.s32.totalorder %v512, 3
        %vm534 = vcmp.lt.s32.totalorder %v512, 4
        %v535 = vsel %vm531, %v515, %v518
        %v536 = vsel %vm534, %v524, 2102212464
        %v537 = vsel %vm533, %v521, %v536
        %v538 = vsel %vm532, %v535, %v537
        %v539 = vsel %vm531, %v518, %v521
        %v540 = vsel %vm534, %v527, 920167782
        %v541 = vsel %vm533, %v524, %v540
        %v542 = vsel %vm532, %v539, %v541
        %v543 = vsel %vm531, %v521, %v524
        %v544 = vsel %vm534, %v530, 1326507024
        %v545 = vsel %vm533, %v527, %v544
        %v546 = vsel %vm532, %v543, %v545
        %v547 = vshll.u32 %v507, 8
        %v548 = vmul.u32.u64.compose %v547, %v546
        %v549 = vextract.low.u32 %v548
        %v550 = vextract.high.u32 %v548
        %v551 = vmul.u32.u64.compose %v547, %v542
        %v552 = vextract.low.u32 %v551
        %v553 = vextract.high.u32 %v551
        %v554 = vmul.u32 %v547, %v538
        %v555 = vadd.s32 %v550, %v552
        %vm556 = vc.u32 %v550, %v552
        %v557 = vadd.s32 %v553, 1
        %v558 = vsel %vm556, %v557, %v553
        %v559 = vadd.s32 %v554, %v558
        %v560 = vadd.s32 %v559, 536870912
        %v561 = vshrl.u32 %v560, 30
        %v562 = vshll.u32 %v561, 30
        %v563 = vsub.s32 %v559, %v562
        %vm564 = vcmp.lt.s32.totalorder %v563, 0
        %v565 = vsub.s32 0, %v563
        %v566 = vsel %vm564, %v565, %v563
        %v567 = vclz %v566
        %v568 = vsub.s32 %v567, 2
        %vm569 = vcmp.gt.s32.totalorder 0, %v568
        %v570 = vsel %vm569, 0, %v568
        %v571 = vsub.s32 32, %v570
        %v572 = vshll.u32 %v563, %v570
        %v573 = vshrl.u32 %v555, %v571
        %v574 = vor.u32 %v572, %v573
        %v575 = vsub.s32 4294967266, %v570
        %v576 = vadd.s32 %v575, 127
        %v577 = vshll.u32 %v576, 23
        %v578 = vor.u32 4788187, %v577
        %v579 = vand.u32 2147483647, %v578
        %v581 = vcvt.s32.f32 %v574
        %v582 = vmul.f32 %v581, %v579
        %v583 = vxor.u32 %v582, 2147483648
        %v584 = vsel %vm501, %v583, %v582
        %v585 = vsub.s32 4, %v561
        %v586 = vsel %vm501, %v585, %v561
        %v587 = vsel %vm500, %v277, %v584
        %v588 = vsel %vm500, 0, %v586
        %v589 = vcosq.f32.pop %v587
        %v590 = vsinq.f32.pop %v587
        %vm591 = vweird.f32 %v277
        %v592 = vand.u32 %v588, 3
        %vm593 = vcmp.lt.s32.totalorder %v592, 2
        %vm594 = vcmp.eq.s32.totalorder %v592, 0
        %v595 = vxor.u32 %v590, 2147483648
        %v596 = vsel %vm594, %v589, %v595
        %vm597 = vcmp.eq.s32.totalorder %v592, 2
        %v598 = vxor.u32 %v589, 2147483648
        %v599 = vsel %vm597, %v598, %v590
        %v600 = vsel %vm593, %v596, %v599
        %v601 = vsel %vm591, nan, %v600
        %v602 = vand.u32 2147483647, %v279
        %vm603 = vcmp.le.f32.partialorder %v602, 0.7853982
        %vm604 = vcmp.lt.s32.totalorder %v279, 0
        %v605 = vand.u32 %v279, 2139095040
        %v606 = vshrl.u32 %v605, 23
        %v607 = vsub.s32 %v606, 127
        %v608 = vand.u32 2147483647, %v279
        %v609 = vand.u32 %v608, 8388607
        %v610 = vor.u32 %v609, 8388608
        %v611 = vsub.s32 0, %v610
        %v612 = vadd.s32 %v607, 1
        %vm613 = vcmp.gt.s32.totalorder %v612, 0
        %v614 = vsel %vm613, %v612, 0
        %v615 = vshrl.u32 %v614, 5
        %v616 = vand.u32 %v614, 31
        %v617 = vsub.s32 32, %v616
        %v618 = vshrl.u32 683565275, %v617
        %v619 = vshll.u32 683565275, %v616
        %v620 = vshrl.u32 2475754826, %v617
        %v621 = vor.u32 %v619, %v620
        %v622 = vshll.u32 2475754826, %v616
        %v623 = vshrl.u32 2131351028, %v617
        %v624 = vor.u32 %v622, %v623
        %v625 = vshll.u32 2131351028, %v616
        %v626 = vshrl.u32 2102212464, %v617
        %v627 = vor.u32 %v625, %v626
        %v628 = vshll.u32 2102212464, %v616
        %v629 = vshrl.u32 920167782, %v617
        %v630 = vor.u32 %v628, %v629
        %v631 = vshll.u32 920167782, %v616
        %v632 = vshrl.u32 1326507024, %v617
        %v633 = vor.u32 %v631, %v632
        %vm634 = vcmp.lt.s32.totalorder %v615, 1
        %vm635 = vcmp.lt.s32.totalorder %v615, 2
        %vm636 = vcmp.lt.s32.totalorder %v615, 3
        %vm637 = vcmp.lt.s32.totalorder %v615, 4
        %v638 = vsel %vm634, %v618, %v621
        %v639 = vsel %vm637, %v627, 2102212464
        %v640 = vsel %vm636, %v624, %v639
        %v641 = vsel %vm635, %v638, %v640
        %v642 = vsel %vm634, %v621, %v624
        %v643 = vsel %vm637, %v630, 920167782
        %v644 = vsel %vm636, %v627, %v643
        %v645 = vsel %vm635, %v642, %v644
        %v646 = vsel %vm634, %v624, %v627
        %v647 = vsel %vm637, %v633, 1326507024
        %v648 = vsel %vm636, %v630, %v647
        %v649 = vsel %vm635, %v646, %v648
        %v650 = vshll.u32 %v610, 8
        %v651 = vmul.u32.u64.compose %v650, %v649
        %v652 = vextract.low.u32 %v651
        %v653 = vextract.high.u32 %v651
        %v654 = vmul.u32.u64.compose %v650, %v645
        %v655 = vextract.low.u32 %v654
        %v656 = vextract.high.u32 %v654
        %v657 = vmul.u32 %v650, %v641
        %v658 = vadd.s32 %v653, %v655
        %vm659 = vc.u32 %v653, %v655
        %v660 = vadd.s32 %v656, 1
        %v661 = vsel %vm659, %v660, %v656
        %v662 = vadd.s32 %v657, %v661
        %v663 = vadd.s32 %v662, 536870912
        %v664 = vshrl.u32 %v663, 30
        %v665 = vshll.u32 %v664, 30
        %v666 = vsub.s32 %v662, %v665
        %vm667 = vcmp.lt.s32.totalorder %v666, 0
        %v668 = vsub.s32 0, %v666
        %v669 = vsel %vm667, %v668, %v666
        %v670 = vclz %v669
        %v671 = vsub.s32 %v670, 2
        %vm672 = vcmp.gt.s32.totalorder 0, %v671
        %v673 = vsel %vm672, 0, %v671
        %v674 = vsub.s32 32, %v673
        %v675 = vshll.u32 %v666, %v673
        %v676 = vshrl.u32 %v658, %v674
        %v677 = vor.u32 %v675, %v676
        %v678 = vsub.s32 4294967266, %v673
        %v679 = vadd.s32 %v678, 127
        %v680 = vshll.u32 %v679, 23
        %v681 = vor.u32 4788187, %v680
        %v682 = vand.u32 2147483647, %v681
        %v684 = vcvt.s32.f32 %v677
        %v685 = vmul.f32 %v684, %v682
        %v686 = vxor.u32 %v685, 2147483648
        %v687 = vsel %vm604, %v686, %v685
        %v688 = vsub.s32 4, %v664
        %v689 = vsel %vm604, %v688, %v664
        %v690 = vsel %vm603, %v279, %v687
        %v691 = vsel %vm603, 0, %v689
        %v692 = vcosq.f32.pop %v690
        %v693 = vsinq.f32.pop %v690
        %vm694 = vweird.f32 %v279
        %v695 = vand.u32 %v691, 3
        %vm696 = vcmp.lt.s32.totalorder %v695, 2
        %vm697 = vcmp.eq.s32.totalorder %v695, 0
        %v698 = vxor.u32 %v693, 2147483648
        %v699 = vsel %vm697, %v692, %v698
        %vm700 = vcmp.eq.s32.totalorder %v695, 2
        %v701 = vxor.u32 %v692, 2147483648
        %v702 = vsel %vm700, %v701, %v693
        %v703 = vsel %vm696, %v699, %v702
        %v704 = vsel %vm694, nan, %v703
        %v705 = vand.u32 2147483647, %v283
        %vm706 = vcmp.le.f32.partialorder %v705, 0.7853982
        %vm707 = vcmp.lt.s32.totalorder %v283, 0
        %v708 = vand.u32 %v283, 2139095040
        %v709 = vshrl.u32 %v708, 23
        %v710 = vsub.s32 %v709, 127
        %v711 = vand.u32 2147483647, %v283
        %v712 = vand.u32 %v711, 8388607
        %v713 = vor.u32 %v712, 8388608
        %v714 = vsub.s32 0, %v713
        %v715 = vadd.s32 %v710, 1
        %vm716 = vcmp.gt.s32.totalorder %v715, 0
        %v717 = vsel %vm716, %v715, 0
        %v718 = vshrl.u32 %v717, 5
        %v719 = vand.u32 %v717, 31
        %v720 = vsub.s32 32, %v719
        %v721 = vshrl.u32 683565275, %v720
        %v722 = vshll.u32 683565275, %v719
        %v723 = vshrl.u32 2475754826, %v720
        %v724 = vor.u32 %v722, %v723
        %v725 = vshll.u32 2475754826, %v719
        %v726 = vshrl.u32 2131351028, %v720
        %v727 = vor.u32 %v725, %v726
        %v728 = vshll.u32 2131351028, %v719
        %v729 = vshrl.u32 2102212464, %v720
        %v730 = vor.u32 %v728, %v729
        %v731 = vshll.u32 2102212464, %v719
        %v732 = vshrl.u32 920167782, %v720
        %v733 = vor.u32 %v731, %v732
        %v734 = vshll.u32 920167782, %v719
        %v735 = vshrl.u32 1326507024, %v720
        %v736 = vor.u32 %v734, %v735
        %vm737 = vcmp.lt.s32.totalorder %v718, 1
        %vm738 = vcmp.lt.s32.totalorder %v718, 2
        %vm739 = vcmp.lt.s32.totalorder %v718, 3
        %vm740 = vcmp.lt.s32.totalorder %v718, 4
        %v741 = vsel %vm737, %v721, %v724
        %v742 = vsel %vm740, %v730, 2102212464
        %v743 = vsel %vm739, %v727, %v742
        %v744 = vsel %vm738, %v741, %v743
        %v745 = vsel %vm737, %v724, %v727
        %v746 = vsel %vm740, %v733, 920167782
        %v747 = vsel %vm739, %v730, %v746
        %v748 = vsel %vm738, %v745, %v747
        %v749 = vsel %vm737, %v727, %v730
        %v750 = vsel %vm740, %v736, 1326507024
        %v751 = vsel %vm739, %v733, %v750
        %v752 = vsel %vm738, %v749, %v751
        %v753 = vshll.u32 %v713, 8
        %v754 = vmul.u32.u64.compose %v753, %v752
        %v755 = vextract.low.u32 %v754
        %v756 = vextract.high.u32 %v754
        %v757 = vmul.u32.u64.compose %v753, %v748
        %v758 = vextract.low.u32 %v757
        %v759 = vextract.high.u32 %v757
        %v760 = vmul.u32 %v753, %v744
        %v761 = vadd.s32 %v756, %v758
        %vm762 = vc.u32 %v756, %v758
        %v763 = vadd.s32 %v759, 1
        %v764 = vsel %vm762, %v763, %v759
        %v765 = vadd.s32 %v760, %v764
        %v766 = vadd.s32 %v765, 536870912
        %v767 = vshrl.u32 %v766, 30
        %v768 = vshll.u32 %v767, 30
        %v769 = vsub.s32 %v765, %v768
        %vm770 = vcmp.lt.s32.totalorder %v769, 0
        %v771 = vsub.s32 0, %v769
        %v772 = vsel %vm770, %v771, %v769
        %v773 = vclz %v772
        %v774 = vsub.s32 %v773, 2
        %vm775 = vcmp.gt.s32.totalorder 0, %v774
        %v776 = vsel %vm775, 0, %v774
        %v777 = vsub.s32 32, %v776
        %v778 = vshll.u32 %v769, %v776
        %v779 = vshrl.u32 %v761, %v777
        %v780 = vor.u32 %v778, %v779
        %v781 = vsub.s32 4294967266, %v776
        %v782 = vadd.s32 %v781, 127
        %v783 = vshll.u32 %v782, 23
        %v784 = vor.u32 4788187, %v783
        %v785 = vand.u32 2147483647, %v784
        %v787 = vcvt.s32.f32 %v780
        %v788 = vmul.f32 %v787, %v785
        %v789 = vxor.u32 %v788, 2147483648
        %v790 = vsel %vm707, %v789, %v788
        %v791 = vsub.s32 4, %v767
        %v792 = vsel %vm707, %v791, %v767
        %v793 = vsel %vm706, %v283, %v790
        %v794 = vsel %vm706, 0, %v792
        %v795 = vcosq.f32.pop %v793
        %v796 = vsinq.f32.pop %v793
        %vm797 = vweird.f32 %v283
        %v798 = vand.u32 %v794, 3
        %vm799 = vcmp.lt.s32.totalorder %v798, 2
        %vm800 = vcmp.eq.s32.totalorder %v798, 0
        %v801 = vxor.u32 %v796, 2147483648
        %v802 = vsel %vm800, %v795, %v801
        %vm803 = vcmp.eq.s32.totalorder %v798, 2
        %v804 = vxor.u32 %v795, 2147483648
        %v805 = vsel %vm803, %v804, %v796
        %v806 = vsel %vm799, %v802, %v805
        %v807 = vsel %vm797, nan, %v806
        %v808 = vand.u32 2147483647, %v285
        %vm809 = vcmp.le.f32.partialorder %v808, 0.7853982
        %vm810 = vcmp.lt.s32.totalorder %v285, 0
        %v811 = vand.u32 %v285, 2139095040
        %v812 = vshrl.u32 %v811, 23
        %v813 = vsub.s32 %v812, 127
        %v814 = vand.u32 2147483647, %v285
        %v815 = vand.u32 %v814, 8388607
        %v816 = vor.u32 %v815, 8388608
        %v817 = vsub.s32 0, %v816
        %v818 = vadd.s32 %v813, 1
        %vm819 = vcmp.gt.s32.totalorder %v818, 0
        %v820 = vsel %vm819, %v818, 0
        %v821 = vshrl.u32 %v820, 5
        %v822 = vand.u32 %v820, 31
        %v823 = vsub.s32 32, %v822
        %v824 = vshrl.u32 683565275, %v823
        %v825 = vshll.u32 683565275, %v822
        %v826 = vshrl.u32 2475754826, %v823
        %v827 = vor.u32 %v825, %v826
        %v828 = vshll.u32 2475754826, %v822
        %v829 = vshrl.u32 2131351028, %v823
        %v830 = vor.u32 %v828, %v829
        %v831 = vshll.u32 2131351028, %v822
        %v832 = vshrl.u32 2102212464, %v823
        %v833 = vor.u32 %v831, %v832
        %v834 = vshll.u32 2102212464, %v822
        %v835 = vshrl.u32 920167782, %v823
        %v836 = vor.u32 %v834, %v835
        %v837 = vshll.u32 920167782, %v822
        %v838 = vshrl.u32 1326507024, %v823
        %v839 = vor.u32 %v837, %v838
        %vm840 = vcmp.lt.s32.totalorder %v821, 1
        %vm841 = vcmp.lt.s32.totalorder %v821, 2
        %vm842 = vcmp.lt.s32.totalorder %v821, 3
        %vm843 = vcmp.lt.s32.totalorder %v821, 4
        %v844 = vsel %vm840, %v824, %v827
        %v845 = vsel %vm843, %v833, 2102212464
        %v846 = vsel %vm842, %v830, %v845
        %v847 = vsel %vm841, %v844, %v846
        %v848 = vsel %vm840, %v827, %v830
        %v849 = vsel %vm843, %v836, 920167782
        %v850 = vsel %vm842, %v833, %v849
        %v851 = vsel %vm841, %v848, %v850
        %v852 = vsel %vm840, %v830, %v833
        %v853 = vsel %vm843, %v839, 1326507024
        %v854 = vsel %vm842, %v836, %v853
        %v855 = vsel %vm841, %v852, %v854
        %v856 = vshll.u32 %v816, 8
        %v857 = vmul.u32.u64.compose %v856, %v855
        %v858 = vextract.low.u32 %v857
        %v859 = vextract.high.u32 %v857
        %v860 = vmul.u32.u64.compose %v856, %v851
        %v861 = vextract.low.u32 %v860
        %v862 = vextract.high.u32 %v860
        %v863 = vmul.u32 %v856, %v847
        %v864 = vadd.s32 %v859, %v861
        %vm865 = vc.u32 %v859, %v861
        %v866 = vadd.s32 %v862, 1
        %v867 = vsel %vm865, %v866, %v862
        %v868 = vadd.s32 %v863, %v867
        %v869 = vadd.s32 %v868, 536870912
        %v870 = vshrl.u32 %v869, 30
        %v871 = vshll.u32 %v870, 30
        %v872 = vsub.s32 %v868, %v871
        %vm873 = vcmp.lt.s32.totalorder %v872, 0
        %v874 = vsub.s32 0, %v872
        %v875 = vsel %vm873, %v874, %v872
        %v876 = vclz %v875
        %v877 = vsub.s32 %v876, 2
        %vm878 = vcmp.gt.s32.totalorder 0, %v877
        %v879 = vsel %vm878, 0, %v877
        %v880 = vsub.s32 32, %v879
        %v881 = vshll.u32 %v872, %v879
        %v882 = vshrl.u32 %v864, %v880
        %v883 = vor.u32 %v881, %v882
        %v884 = vsub.s32 4294967266, %v879
        %v885 = vadd.s32 %v884, 127
        %v886 = vshll.u32 %v885, 23
        %v887 = vor.u32 4788187, %v886
        %v888 = vand.u32 2147483647, %v887
        %v890 = vcvt.s32.f32 %v883
        %v891 = vmul.f32 %v890, %v888
        %v892 = vxor.u32 %v891, 2147483648
        %v893 = vsel %vm810, %v892, %v891
        %v894 = vsub.s32 4, %v870
        %v895 = vsel %vm810, %v894, %v870
        %v896 = vsel %vm809, %v285, %v893
        %v897 = vsel %vm809, 0, %v895
        %v898 = vcosq.f32.pop %v896
        %v899 = vsinq.f32.pop %v896
        %vm900 = vweird.f32 %v285
        %v901 = vand.u32 %v897, 3
        %vm902 = vcmp.lt.s32.totalorder %v901, 2
        %vm903 = vcmp.eq.s32.totalorder %v901, 0
        %v904 = vxor.u32 %v899, 2147483648
        %v905 = vsel %vm903, %v898, %v904
        %vm906 = vcmp.eq.s32.totalorder %v901, 2
        %v907 = vxor.u32 %v898, 2147483648
        %v908 = vsel %vm906, %v907, %v899
        %v909 = vsel %vm902, %v905, %v908
        %v910 = vsel %vm900, nan, %v909
        %v911 = vand.u32 2147483647, %v289
        %vm912 = vcmp.le.f32.partialorder %v911, 0.7853982
        %vm913 = vcmp.lt.s32.totalorder %v289, 0
        %v914 = vand.u32 %v289, 2139095040
        %v915 = vshrl.u32 %v914, 23
        %v916 = vsub.s32 %v915, 127
        %v917 = vand.u32 2147483647, %v289
        %v918 = vand.u32 %v917, 8388607
        %v919 = vor.u32 %v918, 8388608
        %v920 = vsub.s32 0, %v919
        %v921 = vadd.s32 %v916, 1
        %vm922 = vcmp.gt.s32.totalorder %v921, 0
        %v923 = vsel %vm922, %v921, 0
        %v924 = vshrl.u32 %v923, 5
        %v925 = vand.u32 %v923, 31
        %v926 = vsub.s32 32, %v925
        %v927 = vshrl.u32 683565275, %v926
        %v928 = vshll.u32 683565275, %v925
        %v929 = vshrl.u32 2475754826, %v926
        %v930 = vor.u32 %v928, %v929
        %v931 = vshll.u32 2475754826, %v925
        %v932 = vshrl.u32 2131351028, %v926
        %v933 = vor.u32 %v931, %v932
        %v934 = vshll.u32 2131351028, %v925
        %v935 = vshrl.u32 2102212464, %v926
        %v936 = vor.u32 %v934, %v935
        %v937 = vshll.u32 2102212464, %v925
        %v938 = vshrl.u32 920167782, %v926
        %v939 = vor.u32 %v937, %v938
        %v940 = vshll.u32 920167782, %v925
        %v941 = vshrl.u32 1326507024, %v926
        %v942 = vor.u32 %v940, %v941
        %vm943 = vcmp.lt.s32.totalorder %v924, 1
        %vm944 = vcmp.lt.s32.totalorder %v924, 2
        %vm945 = vcmp.lt.s32.totalorder %v924, 3
        %vm946 = vcmp.lt.s32.totalorder %v924, 4
        %v947 = vsel %vm943, %v927, %v930
        %v948 = vsel %vm946, %v936, 2102212464
        %v949 = vsel %vm945, %v933, %v948
        %v950 = vsel %vm944, %v947, %v949
        %v951 = vsel %vm943, %v930, %v933
        %v952 = vsel %vm946, %v939, 920167782
        %v953 = vsel %vm945, %v936, %v952
        %v954 = vsel %vm944, %v951, %v953
        %v955 = vsel %vm943, %v933, %v936
        %v956 = vsel %vm946, %v942, 1326507024
        %v957 = vsel %vm945, %v939, %v956
        %v958 = vsel %vm944, %v955, %v957
        %v959 = vshll.u32 %v919, 8
        %v960 = vmul.u32.u64.compose %v959, %v958
        %v961 = vextract.low.u32 %v960
        %v962 = vextract.high.u32 %v960
        %v963 = vmul.u32.u64.compose %v959, %v954
        %v964 = vextract.low.u32 %v963
        %v965 = vextract.high.u32 %v963
        %v966 = vmul.u32 %v959, %v950
        %v967 = vadd.s32 %v962, %v964
        %vm968 = vc.u32 %v962, %v964
        %v969 = vadd.s32 %v965, 1
        %v970 = vsel %vm968, %v969, %v965
        %v971 = vadd.s32 %v966, %v970
        %v972 = vadd.s32 %v971, 536870912
        %v973 = vshrl.u32 %v972, 30
        %v974 = vshll.u32 %v973, 30
        %v975 = vsub.s32 %v971, %v974
        %vm976 = vcmp.lt.s32.totalorder %v975, 0
        %v977 = vsub.s32 0, %v975
        %v978 = vsel %vm976, %v977, %v975
        %v979 = vclz %v978
        %v980 = vsub.s32 %v979, 2
        %vm981 = vcmp.gt.s32.totalorder 0, %v980
        %v982 = vsel %vm981, 0, %v980
        %v983 = vsub.s32 32, %v982
        %v984 = vshll.u32 %v975, %v982
        %v985 = vshrl.u32 %v967, %v983
        %v986 = vor.u32 %v984, %v985
        %v987 = vsub.s32 4294967266, %v982
        %v988 = vadd.s32 %v987, 127
        %v989 = vshll.u32 %v988, 23
        %v990 = vor.u32 4788187, %v989
        %v991 = vand.u32 2147483647, %v990
        %v993 = vcvt.s32.f32 %v986
        %v994 = vmul.f32 %v993, %v991
        %v995 = vxor.u32 %v994, 2147483648
        %v996 = vsel %vm913, %v995, %v994
        %v997 = vsub.s32 4, %v973
        %v998 = vsel %vm913, %v997, %v973
        %v999 = vsel %vm912, %v289, %v996
        %v1000 = vsel %vm912, 0, %v998
        %v1001 = vcosq.f32.pop %v999
        %v1002 = vsinq.f32.pop %v999
        %vm1003 = vweird.f32 %v289
        %v1004 = vand.u32 %v1000, 3
        %vm1005 = vcmp.lt.s32.totalorder %v1004, 2
        %vm1006 = vcmp.eq.s32.totalorder %v1004, 0
        %v1007 = vxor.u32 %v1002, 2147483648
        %v1008 = vsel %vm1006, %v1001, %v1007
        %vm1009 = vcmp.eq.s32.totalorder %v1004, 2
        %v1010 = vxor.u32 %v1001, 2147483648
        %v1011 = vsel %vm1009, %v1010, %v1002
        %v1012 = vsel %vm1005, %v1008, %v1011
        %v1013 = vsel %vm1003, nan, %v1012
        %v1014 = vand.u32 2147483647, %v291
        %vm1015 = vcmp.le.f32.partialorder %v1014, 0.7853982
        %vm1016 = vcmp.lt.s32.totalorder %v291, 0
        %v1017 = vand.u32 %v291, 2139095040
        %v1018 = vshrl.u32 %v1017, 23
        %v1019 = vsub.s32 %v1018, 127
        %v1020 = vand.u32 2147483647, %v291
        %v1021 = vand.u32 %v1020, 8388607
        %v1022 = vor.u32 %v1021, 8388608
        %v1023 = vsub.s32 0, %v1022
        %v1024 = vadd.s32 %v1019, 1
        %vm1025 = vcmp.gt.s32.totalorder %v1024, 0
        %v1026 = vsel %vm1025, %v1024, 0
        %v1027 = vshrl.u32 %v1026, 5
        %v1028 = vand.u32 %v1026, 31
        %v1029 = vsub.s32 32, %v1028
        %v1030 = vshrl.u32 683565275, %v1029
        %v1031 = vshll.u32 683565275, %v1028
        %v1032 = vshrl.u32 2475754826, %v1029
        %v1033 = vor.u32 %v1031, %v1032
        %v1034 = vshll.u32 2475754826, %v1028
        %v1035 = vshrl.u32 2131351028, %v1029
        %v1036 = vor.u32 %v1034, %v1035
        %v1037 = vshll.u32 2131351028, %v1028
        %v1038 = vshrl.u32 2102212464, %v1029
        %v1039 = vor.u32 %v1037, %v1038
        %v1040 = vshll.u32 2102212464, %v1028
        %v1041 = vshrl.u32 920167782, %v1029
        %v1042 = vor.u32 %v1040, %v1041
        %v1043 = vshll.u32 920167782, %v1028
        %v1044 = vshrl.u32 1326507024, %v1029
        %v1045 = vor.u32 %v1043, %v1044
        %vm1046 = vcmp.lt.s32.totalorder %v1027, 1
        %vm1047 = vcmp.lt.s32.totalorder %v1027, 2
        %vm1048 = vcmp.lt.s32.totalorder %v1027, 3
        %vm1049 = vcmp.lt.s32.totalorder %v1027, 4
        %v1050 = vsel %vm1046, %v1030, %v1033
        %v1051 = vsel %vm1049, %v1039, 2102212464
        %v1052 = vsel %vm1048, %v1036, %v1051
        %v1053 = vsel %vm1047, %v1050, %v1052
        %v1054 = vsel %vm1046, %v1033, %v1036
        %v1055 = vsel %vm1049, %v1042, 920167782
        %v1056 = vsel %vm1048, %v1039, %v1055
        %v1057 = vsel %vm1047, %v1054, %v1056
        %v1058 = vsel %vm1046, %v1036, %v1039
        %v1059 = vsel %vm1049, %v1045, 1326507024
        %v1060 = vsel %vm1048, %v1042, %v1059
        %v1061 = vsel %vm1047, %v1058, %v1060
        %v1062 = vshll.u32 %v1022, 8
        %v1063 = vmul.u32.u64.compose %v1062, %v1061
        %v1064 = vextract.low.u32 %v1063
        %v1065 = vextract.high.u32 %v1063
        %v1066 = vmul.u32.u64.compose %v1062, %v1057
        %v1067 = vextract.low.u32 %v1066
        %v1068 = vextract.high.u32 %v1066
        %v1069 = vmul.u32 %v1062, %v1053
        %v1070 = vadd.s32 %v1065, %v1067
        %vm1071 = vc.u32 %v1065, %v1067
        %v1072 = vadd.s32 %v1068, 1
        %v1073 = vsel %vm1071, %v1072, %v1068
        %v1074 = vadd.s32 %v1069, %v1073
        %v1075 = vadd.s32 %v1074, 536870912
        %v1076 = vshrl.u32 %v1075, 30
        %v1077 = vshll.u32 %v1076, 30
        %v1078 = vsub.s32 %v1074, %v1077
        %vm1079 = vcmp.lt.s32.totalorder %v1078, 0
        %v1080 = vsub.s32 0, %v1078
        %v1081 = vsel %vm1079, %v1080, %v1078
        %v1082 = vclz %v1081
        %v1083 = vsub.s32 %v1082, 2
        %vm1084 = vcmp.gt.s32.totalorder 0, %v1083
        %v1085 = vsel %vm1084, 0, %v1083
        %v1086 = vsub.s32 32, %v1085
        %v1087 = vshll.u32 %v1078, %v1085
        %v1088 = vshrl.u32 %v1070, %v1086
        %v1089 = vor.u32 %v1087, %v1088
        %v1090 = vsub.s32 4294967266, %v1085
        %v1091 = vadd.s32 %v1090, 127
        %v1092 = vshll.u32 %v1091, 23
        %v1093 = vor.u32 4788187, %v1092
        %v1094 = vand.u32 2147483647, %v1093
        %v1096 = vcvt.s32.f32 %v1089
        %v1097 = vmul.f32 %v1096, %v1094
        %v1098 = vxor.u32 %v1097, 2147483648
        %v1099 = vsel %vm1016, %v1098, %v1097
        %v1100 = vsub.s32 4, %v1076
        %v1101 = vsel %vm1016, %v1100, %v1076
        %v1102 = vsel %vm1015, %v291, %v1099
        %v1103 = vsel %vm1015, 0, %v1101
        %v1104 = vcosq.f32.pop %v1102
        %v1105 = vsinq.f32.pop %v1102
        %vm1106 = vweird.f32 %v291
        %v1107 = vand.u32 %v1103, 3
        %vm1108 = vcmp.lt.s32.totalorder %v1107, 2
        %vm1109 = vcmp.eq.s32.totalorder %v1107, 0
        %v1110 = vxor.u32 %v1105, 2147483648
        %v1111 = vsel %vm1109, %v1104, %v1110
        %vm1112 = vcmp.eq.s32.totalorder %v1107, 2
        %v1113 = vxor.u32 %v1104, 2147483648
        %v1114 = vsel %vm1112, %v1113, %v1105
        %v1115 = vsel %vm1108, %v1111, %v1114
        %v1116 = vsel %vm1106, nan, %v1115
        %1117 = vst [vmem:[%s176] sm:$0xff] %v395
        %1118 = vst [vmem:[%s176 + $0x8] sm:$0xff] %v498
        %1119 = vst [vmem:[%s176 + $0x10] sm:$0xff] %v601
        %1120 = vst [vmem:[%s176 + $0x18] sm:$0xff] %v704
        %1121 = vst [vmem:[%s176 + $0x20] sm:$0xff] %v807
        %1122 = vst [vmem:[%s176 + $0x28] sm:$0xff] %v910
        %1123 = vst [vmem:[%s176 + $0x30] sm:$0xff] %v1013
        %1124 = vst [vmem:[%s176 + $0x38] sm:$0xff] %v1116
        %s1125 = sand.u32 %s75, 1
        %s1126 = scalar_lea.sflag [#allocation4], %s1125
        %s1127 = sand.u32 %s75, 1
        %s1128 = smul.addr %s1127, 64
        %s1129 = scalar_lea.vmem [#allocation7], %s1128
        // Predicated region
        $region37: #{tpu_custom_call.1} parent=27 // pred_check
          %p1130 = pneg %p85
        $region38: #{tpu_custom_call.1} parent=27 // pred_check_branch
          %1132 = sbr.rel (%p1130) target = $region40
        $region39: #{tpu_custom_call.1} parent=27 // pred_region
          %s1134 = ssub.s32 1024, 1024
          %1135 = vsyncadd %s1126, %s1134
          %s1136 = smul.addr %s20, 8
          %s1137 = smul.addr %s1136, 128
          %s1138 = scalar_lea.hbm %s2, %s1137
          %s1139 = sshll.u32 %s1129, 4
          %s1140 = int_to_ptr.vmem [resolvable:$true] %s1139
          %1145 = dma.vmem_to_hbm [thread:$0]  %s1140, 1024, %s1138, %s1126, 256, 256, 16
        $region40: #{tpu_custom_call.1} parent=27 // pred_fallthru
          _
      $region28: #{tpu_custom_call.1} parent=5 // pred_fallthru
        _
      %p1146 = scmp.le.s32.totalorder 2, %s15
      // Predicated region
      $region41: #{tpu_custom_call.1} parent=5 // pred_check
        %p1147 = pneg %p1146
      $region42: #{tpu_custom_call.1} parent=5 // pred_check_branch
        %1149 = sbr.rel (%p1147) target = $region44
      $region43: #{tpu_custom_call.1} parent=5 // pred_region
        %s1150 = ssub.s32 %s15, 2
        // Predicated region
        $region45: #{tpu_custom_call.1} parent=43 // pred_check
          %p1151 = pneg %p91
        $region46: #{tpu_custom_call.1} parent=43 // pred_check_branch
          %1153 = sbr.rel (%p1151) target = $region48
        $region47: #{tpu_custom_call.1} parent=43 // pred_region
          %s1154 = sand.u32 %s76, 1
          %s1155 = scalar_lea.sflag [#allocation4], %s1154
          %s1156 = sand.u32 %s76, 1
          %s1157 = smul.addr %s1156, 64
          %s1158 = scalar_lea.vmem [#allocation7], %s1157
          %1159 = dma.done %s1155, 1024
        $region48: #{tpu_custom_call.1} parent=43 // pred_fallthru
          _
      $region44: #{tpu_custom_call.1} parent=5 // pred_fallthru
        _
    $region6: #{tpu_custom_call.1} parent=1 // loop_footer
      %s19 = sadd.s32 1, %s15
    $region7: #{tpu_custom_call.1} parent=1 // loop_footer_branch
      %14 = sbr.rel target = $region3
    $region8: #{tpu_custom_call.1} parent=1 // loop_exit
      _
    %1160 = vsyncpa [#allocation3], 1
    %s1161 = scalar_lea.sflag [#allocation3], 1
    %1162 = vsyncpa %s1161, 1
    %1163 = vsyncpa [#allocation6], 1
    %1164 = vsyncpa [#allocation4], 1
    %s1165 = scalar_lea.sflag [#allocation4], 1
    %1166 = vsyncpa %s1165, 1

</llo_original>
